<compile_context>
chip_gen: v6e
topology: v6e:2x2x1
jax: 0.10.0
libtpu: 0.0.40
codegen_flags: <defaults>
</compile_context>

<pallas_src>
import functools

import jax
import jax.numpy as jnp
from jax.experimental import pallas as pl
from jax.experimental.pallas import tpu as pltpu


def _round_up(x, m):
    return (x + m - 1) // m * m


# ----------------------------- Pallas kernel ------------------------------ #
def _mlp_fused_kernel(*refs, num_layers, activation_type):
    """Chained  h = ReLU(h @ W0) @ W1 ...  entirely VMEM-resident.

    refs = (x_ref, w0_ref, ..., w{L-1}_ref, o_ref)."""
    x_ref = refs[0]
    w_refs = refs[1:1 + num_layers]
    o_ref = refs[1 + num_layers]

    h = x_ref[...]                                    # [tm, D0_pad] bf16
    for i in range(num_layers):
        w = w_refs[i][...]                            # [Din_pad, Dout_pad] bf16
        # bf16 MXU inputs, f32 accumulation.
        y = jnp.dot(h, w, preferred_element_type=jnp.float32)
        if i < num_layers - 1:
            if activation_type == "ReLU":
                y = jnp.maximum(y, 0.0)
            h = y.astype(w_refs[i + 1].dtype)         # keep chain in bf16
        else:
            h = y                                     # final layer stays f32
    o_ref[...] = h.astype(o_ref.dtype)


# ------------------------------ wrapper ------------------------------------ #
@functools.partial(jax.jit, static_argnames=("activation_type",))
def mlp_forward(x, prepared_weights, activation_type):
    """x: [B, input_dim] f32. prepared_weights: list of bf16 [Din_pad, Dout_pad]."""
    B, D0 = x.shape
    num_layers = len(prepared_weights)
    D0_pad = prepared_weights[0].shape[0]
    DL_pad = prepared_weights[-1].shape[1]
    max_dim = max(max(w.shape) for w in prepared_weights)
    compute_dtype = prepared_weights[0].dtype

    # Batch tile: sublane-aligned (multiple of 8), big enough to amortize the
    # per-grid-step overhead, capped so large batches still tile and the
    # "parallel" grid axis has extent >= 2 (v7x dual-TC sharding).
    tm = min(_round_up(B, 8), 512)
    B_pad = _round_up(B, tm)

    # Pad + cast input into the lane-dense bf16 padded layout (fused XLA op).
    # bf16 input halves the HBM->VMEM DMA traffic for the activations.
    if (B_pad, D0_pad) == (B, D0):
        x_p = x.astype(compute_dtype)
    else:
        x_p = jnp.zeros((B_pad, D0_pad), compute_dtype)
        x_p = x_p.at[:B, :D0].set(x.astype(compute_dtype))

    grid = (B_pad // tm,)

    in_specs = [pl.BlockSpec((tm, D0_pad), lambda i: (i, 0))]
    # Weights: whole array, constant block index -> fetched once, stays resident.
    for w in prepared_weights:
        in_specs.append(pl.BlockSpec(w.shape, lambda i: (0, 0)))
    out_specs = pl.BlockSpec((tm, DL_pad), lambda i: (i, 0))

    # VMEM budget: double-buffered x/out tiles + resident weights + a few live
    # intermediates. Stay under the v7x per-TC physical limit (64 MiB).
    w_bytes = sum(w.size * w.dtype.itemsize for w in prepared_weights)
    io_bytes = tm * (D0_pad * 2 + DL_pad * 4)
    est = 2 * io_bytes + w_bytes + 4 * tm * max_dim * 4
    vmem_limit = int(min(max(est, 32 << 20), 64 << 20))

    out_p = pl.pallas_call(
        functools.partial(
            _mlp_fused_kernel,
            num_layers=num_layers,
            activation_type=activation_type,
        ),
        out_shape=jax.ShapeDtypeStruct((B_pad, DL_pad), jnp.float32),
        grid_spec=pltpu.PrefetchScalarGridSpec(
            num_scalar_prefetch=0,
            grid=grid,
            in_specs=in_specs,
            out_specs=out_specs,
        ),
        compiler_params=pltpu.CompilerParams(
            dimension_semantics=("parallel",),
            vmem_limit_bytes=vmem_limit,
        ),
    )(x_p, *prepared_weights)

    # The final Linear maps back to input_dim (per the MLP spec) -> slice to [B, D0].
    return out_p[:B, :D0]


# ------------------------------ params -------------------------------------- #
def init_mlp_params(key, input_dim, hidden_dims):
    """nn.Linear(bias=False) init: U(-1/sqrt(in), 1/sqrt(in)); PyTorch layout [out, in]."""
    dims = [input_dim] + list(hidden_dims) + [input_dim]
    weights = []
    for i in range(len(dims) - 1):
        in_d, out_d = dims[i], dims[i + 1]
        key, sub = jax.random.split(key)
        bound = 1.0 / float(in_d) ** 0.5
        w = jax.random.uniform(sub, (out_d, in_d), jnp.float32, -bound, bound)
        weights.append(w)
    return weights


def prepare_weights(weights, compute_dtype=jnp.bfloat16):
    """One-time prep: transpose to [in, out], zero-pad dims to 128, cast to bf16."""
    prepared = []
    for w in weights:                           # PyTorch layout [out, in]
        out_d, in_d = w.shape
        in_p, out_p = _round_up(in_d, 128), _round_up(out_d, 128)
        wt = jnp.zeros((in_p, out_p), compute_dtype)
        wt = wt.at[:in_d, :out_d].set(w.T.astype(compute_dtype))
        prepared.append(wt)
    return prepared


# ----------------------------- references ----------------------------------- #
def mlp_reference_f32(x, weights, activation_type):
    h = x
    for i, w in enumerate(weights):
        h = h @ w.T
        if i < len(weights) - 1 and activation_type == "ReLU":
            h = jnp.maximum(h, 0.0)
    return h


def mlp_reference_bf16(x, weights, activation_type):
    """Mirrors the kernel's numerics: bf16 MXU inputs, f32 accumulation."""
    h = x.astype(jnp.bfloat16)
    for i, w in enumerate(weights):
        y = jnp.dot(h, w.T.astype(jnp.bfloat16),
                    preferred_element_type=jnp.float32)
        if i < len(weights) - 1:
            if activation_type == "ReLU":
                y = jnp.maximum(y, 0.0)
            h = y.astype(jnp.bfloat16)
        else:
            h = y
    return h


# --------------------------------- main -------------------------------------- #
if __name__ == "__main__":
    key = jax.random.PRNGKey(0)
    batch = 8
    input_dim = 32
    hidden_dims = [64, 128, 64]
    activation_type = "ReLU"

    k_x, k_w = jax.random.split(key)
    x = jax.random.normal(k_x, (batch, input_dim), dtype=jnp.float32)
    weights = init_mlp_params(k_w, input_dim, hidden_dims)
    prepared = prepare_weights(weights)   # one-time: pad + transpose + bf16

    out = mlp_forward(x, prepared, activation_type)
    out = jax.block_until_ready(out)
    assert out.shape == (batch, input_dim)

    ref_bf16 = mlp_reference_bf16(x, weights, activation_type)
    ref_f32 = mlp_reference_f32(x, weights, activation_type)
    assert jnp.allclose(out, ref_bf16, atol=1e-2, rtol=1e-2), \
        float(jnp.max(jnp.abs(out - ref_bf16)))
    assert jnp.allclose(out, ref_f32, atol=1e-1, rtol=1e-1), \
        float(jnp.max(jnp.abs(out - ref_f32)))

    # Also exercise the 'linear' activation path (nn.Identity between layers).
    out_lin = jax.block_until_ready(mlp_forward(x, prepared, "linear"))
    ref_lin = mlp_reference_f32(x, weights, "linear")
    assert jnp.allclose(out_lin, ref_lin, atol=1e-1, rtol=1e-1), \
        float(jnp.max(jnp.abs(out_lin - ref_lin)))

    print("KERNEL_OK")
</pallas_src>

<mosaic_0001>
module attributes {stable_mosaic.version = 11 : i64} {
  func.func @_mlp_fused_kernel(%arg0: i32, %arg1: memref<8x128xbf16, #tpu.memory_space<vmem>>, %arg2: memref<128x128xbf16, #tpu.memory_space<vmem>>, %arg3: memref<128x128xbf16, #tpu.memory_space<vmem>>, %arg4: memref<128x128xbf16, #tpu.memory_space<vmem>>, %arg5: memref<128x128xbf16, #tpu.memory_space<vmem>>, %arg6: memref<8x128xf32, #tpu.memory_space<vmem>>) attributes {dimension_semantics = [#tpu.dimension_semantics<parallel>], iteration_bounds = array<i64: 1>, scalar_prefetch = 0 : i64, scratch_operands = 0 : i64, tpu.core_type = #tpu.core_type<tc>, window_params = [{transform_indices = @transform_0, window_bounds = array<i64: 8, 128>}, {pipeline_mode = #tpu.pipeline_mode<synchronous>, transform_indices = @transform_1, window_bounds = array<i64: 128, 128>}, {pipeline_mode = #tpu.pipeline_mode<synchronous>, transform_indices = @transform_2, window_bounds = array<i64: 128, 128>}, {pipeline_mode = #tpu.pipeline_mode<synchronous>, transform_indices = @transform_3, window_bounds = array<i64: 128, 128>}, {pipeline_mode = #tpu.pipeline_mode<synchronous>, transform_indices = @transform_4, window_bounds = array<i64: 128, 128>}, {transform_indices = @transform_5, window_bounds = array<i64: 8, 128>}]} {
    %c0 = arith.constant 0 : index
    %c0_0 = arith.constant 0 : index
    %0 = vector.load %arg1[%c0, %c0_0] : memref<8x128xbf16, #tpu.memory_space<vmem>>, vector<8x128xbf16>
    %c0_1 = arith.constant 0 : index
    %c0_2 = arith.constant 0 : index
    %1 = vector.load %arg2[%c0_1, %c0_2] : memref<128x128xbf16, #tpu.memory_space<vmem>>, vector<128x128xbf16>
    %cst = arith.constant dense<0.000000e+00> : vector<8x128xf32>
    %2 = tpu.matmul %0, %1, %cst {dimension_numbers = #tpu.dot_dimension_numbers<[1], [0], [0], [1], [0, 0, 1, 1], [], []>} : vector<8x128xbf16>, vector<128x128xbf16>, vector<8x128xf32> -> vector<8x128xf32>
    %cst_3 = arith.constant 0.000000e+00 : f32
    %3 = vector.broadcast %cst_3 : f32 to vector<8x128xf32>
    %4 = arith.maximumf %2, %3 : vector<8x128xf32>
    %5 = arith.truncf %4 : vector<8x128xf32> to vector<8x128xbf16>
    %c0_4 = arith.constant 0 : index
    %c0_5 = arith.constant 0 : index
    %6 = vector.load %arg3[%c0_4, %c0_5] : memref<128x128xbf16, #tpu.memory_space<vmem>>, vector<128x128xbf16>
    %cst_6 = arith.constant dense<0.000000e+00> : vector<8x128xf32>
    %7 = tpu.matmul %5, %6, %cst_6 {dimension_numbers = #tpu.dot_dimension_numbers<[1], [0], [0], [1], [0, 0, 1, 1], [], []>} : vector<8x128xbf16>, vector<128x128xbf16>, vector<8x128xf32> -> vector<8x128xf32>
    %cst_7 = arith.constant 0.000000e+00 : f32
    %8 = vector.broadcast %cst_7 : f32 to vector<8x128xf32>
    %9 = arith.maximumf %7, %8 : vector<8x128xf32>
    %10 = arith.truncf %9 : vector<8x128xf32> to vector<8x128xbf16>
    %c0_8 = arith.constant 0 : index
    %c0_9 = arith.constant 0 : index
    %11 = vector.load %arg4[%c0_8, %c0_9] : memref<128x128xbf16, #tpu.memory_space<vmem>>, vector<128x128xbf16>
    %cst_10 = arith.constant dense<0.000000e+00> : vector<8x128xf32>
    %12 = tpu.matmul %10, %11, %cst_10 {dimension_numbers = #tpu.dot_dimension_numbers<[1], [0], [0], [1], [0, 0, 1, 1], [], []>} : vector<8x128xbf16>, vector<128x128xbf16>, vector<8x128xf32> -> vector<8x128xf32>
    %cst_11 = arith.constant 0.000000e+00 : f32
    %13 = vector.broadcast %cst_11 : f32 to vector<8x128xf32>
    %14 = arith.maximumf %12, %13 : vector<8x128xf32>
    %15 = arith.truncf %14 : vector<8x128xf32> to vector<8x128xbf16>
    %c0_12 = arith.constant 0 : index
    %c0_13 = arith.constant 0 : index
    %16 = vector.load %arg5[%c0_12, %c0_13] : memref<128x128xbf16, #tpu.memory_space<vmem>>, vector<128x128xbf16>
    %cst_14 = arith.constant dense<0.000000e+00> : vector<8x128xf32>
    %17 = tpu.matmul %15, %16, %cst_14 {dimension_numbers = #tpu.dot_dimension_numbers<[1], [0], [0], [1], [0, 0, 1, 1], [], []>} : vector<8x128xbf16>, vector<128x128xbf16>, vector<8x128xf32> -> vector<8x128xf32>
    %c0_15 = arith.constant 0 : index
    %c0_16 = arith.constant 0 : index
    %18 = vector.load %arg6[%c0_15, %c0_16] : memref<8x128xf32, #tpu.memory_space<vmem>>, vector<8x128xf32>
    tpu.vector_store %arg6[%c0_15, %c0_16], %17 {strides = array<i32>} : memref<8x128xf32, #tpu.memory_space<vmem>>, vector<8x128xf32>,
    return
  }
  func.func @transform_0(%arg0: i32) -> (i32, i32) {
    %c0_i32 = arith.constant 0 : i32
    %c0_i32_0 = arith.constant 0 : i32
    return %arg0, %c0_i32 : i32, i32
  }
  func.func @transform_1(%arg0: i32) -> (i32, i32) {
    %c0_i32 = arith.constant 0 : i32
    %c0_i32_0 = arith.constant 0 : i32
    %c0_i32_1 = arith.constant 0 : i32
    return %c0_i32, %c0_i32_0 : i32, i32
  }
  func.func @transform_2(%arg0: i32) -> (i32, i32) {
    %c0_i32 = arith.constant 0 : i32
    %c0_i32_0 = arith.constant 0 : i32
    %c0_i32_1 = arith.constant 0 : i32
    return %c0_i32, %c0_i32_0 : i32, i32
  }
  func.func @transform_3(%arg0: i32) -> (i32, i32) {
    %c0_i32 = arith.constant 0 : i32
    %c0_i32_0 = arith.constant 0 : i32
    %c0_i32_1 = arith.constant 0 : i32
    return %c0_i32, %c0_i32_0 : i32, i32
  }
  func.func @transform_4(%arg0: i32) -> (i32, i32) {
    %c0_i32 = arith.constant 0 : i32
    %c0_i32_0 = arith.constant 0 : i32
    %c0_i32_1 = arith.constant 0 : i32
    return %c0_i32, %c0_i32_0 : i32, i32
  }
  func.func @transform_5(%arg0: i32) -> (i32, i32) {
    %c0_i32 = arith.constant 0 : i32
    %c0_i32_0 = arith.constant 0 : i32
    return %arg0, %c0_i32 : i32, i32
  }
}

</mosaic_0001>

<llo_original>
// kernel: mlp_forward.1
$region0: #{mlp_forward.1}
  #allocation0 [shape = 'u32[]', space=smem, size = 0x4, offset = 0x4, fixed_abs, tag = 'smem constant byte address 0x4 - core index']
  #allocation1 [shape = 'u32[144,128]{1,0:T(1,128)}', space=vmem, size = 0x12000, scoped, tag = 'internal scratch']
  %s0 = inlined_call_operand.vmem [shape: bf16[8,128], index: 0, kind: input, shape index: {}]
  %s1 = inlined_call_operand.hbm [shape: bf16[128,128], index: 1, kind: input, shape index: {}]
  %s2 = inlined_call_operand.hbm [shape: bf16[128,128], index: 2, kind: input, shape index: {}]
  %s3 = inlined_call_operand.hbm [shape: bf16[128,128], index: 3, kind: input, shape index: {}]
  %s4 = inlined_call_operand.hbm [shape: bf16[128,128], index: 4, kind: input, shape index: {}]
  %s5 = inlined_call_operand.hbm [shape: f32[8,128], index: 5, kind: output, shape index: {}]
  %s6 = sld [smem:[#allocation0]]
  $region46: #{mlp_forward.1} parent=0
    _
  %s8 = ssub.s32 1, %s6
  %s9 = scalar_select 0, %s8, %s6
  $region1: #{mlp_forward.1} parent=0
    #allocation2 [shape = 'u8[32768]{0}', space=vmem, size = 0x8000, scoped, tag = 'input window, operand 1, single buffered']
    #allocation3 [shape = 's32[1]{0}', space=sflag, size = 0x4, scoped, tag = 'scoped memory for mlp_forward.1']
    #allocation4 [shape = 's32[1]{0}', space=sflag, size = 0x4, scoped, tag = 'scoped memory for mlp_forward.1']
    #allocation5 [shape = 'u8[32768]{0}', space=vmem, size = 0x8000, scoped, tag = 'input window, operand 2, single buffered']
    #allocation6 [shape = 's32[1]{0}', space=sflag, size = 0x4, scoped, tag = 'scoped memory for mlp_forward.1']
    #allocation7 [shape = 'u8[32768]{0}', space=vmem, size = 0x8000, scoped, tag = 'input window, operand 3, single buffered']
    #allocation8 [shape = 'u8[32768]{0}', space=vmem, size = 0x8000, scoped, tag = 'input window, operand 4, single buffered']
    #allocation9 [shape = 's32[1]{0}', space=sflag, size = 0x4, scoped, tag = 'scoped memory for mlp_forward.1']
    #allocation10 [shape = 'u8[4096]{0}', space=vmem, size = 0x1000, scoped, tag = 'output window, operand 0, single buffered']
    %10 = vsyncpa [#allocation3], 0
    %11 = vsyncpa [#allocation6], 0
    %12 = vsyncpa [#allocation9], 0
    %13 = vsyncpa [#allocation4], 0
    // Predicated region
    $region2: #{mlp_forward.1} parent=1 // pred_check
      _
    $region3: #{mlp_forward.1} parent=1 // pred_check_branch
      %15 = sbr.rel (0) target = $region5
    $region4: #{mlp_forward.1} parent=1 // pred_region
      _
    $region5: #{mlp_forward.1} parent=1 // pred_fallthru
      _
    // Predicated region
    $region6: #{mlp_forward.1} parent=1 // pred_check
      _
    $region7: #{mlp_forward.1} parent=1 // pred_check_branch
      %17 = sbr.rel (0) target = $region9
    $region8: #{mlp_forward.1} parent=1 // pred_region
      %s19 = ssub.s32 1024, 1024
      %20 = vsyncadd [#allocation3], %s19
      %s21 = sshll.u32 [#allocation2], 4
      %s22 = int_to_ptr.vmem [resolvable:$true] %s21
      %27 = dma.hbm_to_vmem [thread:$0]  %s1, 1024, %s22, [#allocation3], 64, 64, 4
    $region9: #{mlp_forward.1} parent=1 // pred_fallthru
      _
    // Predicated region
    $region10: #{mlp_forward.1} parent=1 // pred_check
      _
    $region11: #{mlp_forward.1} parent=1 // pred_check_branch
      %29 = sbr.rel (0) target = $region13
    $region12: #{mlp_forward.1} parent=1 // pred_region
      %s31 = ssub.s32 1024, 1024
      %32 = vsyncadd [#allocation6], %s31
      %s33 = sshll.u32 [#allocation5], 4
      %s34 = int_to_ptr.vmem [resolvable:$true] %s33
      %39 = dma.hbm_to_vmem [thread:$0]  %s2, 1024, %s34, [#allocation6], 64, 64, 4
    $region13: #{mlp_forward.1} parent=1 // pred_fallthru
      _
    // Predicated region
    $region14: #{mlp_forward.1} parent=1 // pred_check
      _
    $region15: #{mlp_forward.1} parent=1 // pred_check_branch
      %41 = sbr.rel (0) target = $region17
    $region16: #{mlp_forward.1} parent=1 // pred_region
      %s43 = ssub.s32 1024, 1024
      %44 = vsyncadd [#allocation6], %s43
      %s45 = sshll.u32 [#allocation7], 4
      %s46 = int_to_ptr.vmem [resolvable:$true] %s45
      %51 = dma.hbm_to_vmem [thread:$0]  %s3, 1024, %s46, [#allocation6], 64, 64, 4
    $region17: #{mlp_forward.1} parent=1 // pred_fallthru
      _
    // Predicated region
    $region18: #{mlp_forward.1} parent=1 // pred_check
      _
    $region19: #{mlp_forward.1} parent=1 // pred_check_branch
      %53 = sbr.rel (0) target = $region21
    $region20: #{mlp_forward.1} parent=1 // pred_region
      %s55 = ssub.s32 1024, 1024
      %56 = vsyncadd [#allocation9], %s55
      %s57 = sshll.u32 [#allocation8], 4
      %s58 = int_to_ptr.vmem [resolvable:$true] %s57
      %63 = dma.hbm_to_vmem [thread:$0]  %s4, 1024, %s58, [#allocation9], 64, 64, 4
    $region21: #{mlp_forward.1} parent=1 // pred_fallthru
      _
    // Predicated region
    $region22: #{mlp_forward.1} parent=1 // pred_check
      _
    $region23: #{mlp_forward.1} parent=1 // pred_check_branch
      %65 = sbr.rel (0) target = $region25
    $region24: #{mlp_forward.1} parent=1 // pred_region
      %66 = dma.done [#allocation3], 1024
    $region25: #{mlp_forward.1} parent=1 // pred_fallthru
      _
    // Predicated region
    $region26: #{mlp_forward.1} parent=1 // pred_check
      _
    $region27: #{mlp_forward.1} parent=1 // pred_check_branch
      %68 = sbr.rel (0) target = $region29
    $region28: #{mlp_forward.1} parent=1 // pred_region
      %69 = dma.done [#allocation6], 1024
    $region29: #{mlp_forward.1} parent=1 // pred_fallthru
      _
    // Predicated region
    $region30: #{mlp_forward.1} parent=1 // pred_check
      _
    $region31: #{mlp_forward.1} parent=1 // pred_check_branch
      %71 = sbr.rel (0) target = $region33
    $region32: #{mlp_forward.1} parent=1 // pred_region
      %72 = dma.done [#allocation6], 1024
    $region33: #{mlp_forward.1} parent=1 // pred_fallthru
      _
    // Predicated region
    $region34: #{mlp_forward.1} parent=1 // pred_check
      _
    $region35: #{mlp_forward.1} parent=1 // pred_check_branch
      %74 = sbr.rel (0) target = $region37
    $region36: #{mlp_forward.1} parent=1 // pred_region
      %75 = dma.done [#allocation9], 1024
    $region37: #{mlp_forward.1} parent=1 // pred_fallthru
      _
    %v77 = vld [vmem:[%s0] sm:$0xf]
    %v78 = vld [vmem:[#allocation2] sm:$0xf]
    %v79 = vld [vmem:[#allocation2 + $0x4] sm:$0xf]
    %v80 = vld [vmem:[#allocation2 + $0x8] sm:$0xf]
    %v81 = vld [vmem:[#allocation2 + $0xc] sm:$0xf]
    %v82 = vld [vmem:[#allocation2 + $0x10] sm:$0xf]
    %v83 = vld [vmem:[#allocation2 + $0x14] sm:$0xf]
    %v84 = vld [vmem:[#allocation2 + $0x18] sm:$0xf]
    %v85 = vld [vmem:[#allocation2 + $0x1c] sm:$0xf]
    %v86 = vld [vmem:[#allocation2 + $0x20] sm:$0xf]
    %v87 = vld [vmem:[#allocation2 + $0x24] sm:$0xf]
    %v88 = vld [vmem:[#allocation2 + $0x28] sm:$0xf]
    %v89 = vld [vmem:[#allocation2 + $0x2c] sm:$0xf]
    %v90 = vld [vmem:[#allocation2 + $0x30] sm:$0xf]
    %v91 = vld [vmem:[#allocation2 + $0x34] sm:$0xf]
    %v92 = vld [vmem:[#allocation2 + $0x38] sm:$0xf]
    %v93 = vld [vmem:[#allocation2 + $0x3c] sm:$0xf]
    %v110 = vunpack.c.l.b16 %v78
    %v111 = vunpack.c.l.b16 %v79
    %v112 = vunpack.c.l.b16 %v80
    %v113 = vunpack.c.l.b16 %v81
    %v114 = vunpack.c.l.b16 %v82
    %v115 = vunpack.c.l.b16 %v83
    %v116 = vunpack.c.l.b16 %v84
    %v117 = vunpack.c.l.b16 %v85
    %v118 = vunpack.c.l.b16 %v86
    %v119 = vunpack.c.l.b16 %v87
    %v120 = vunpack.c.l.b16 %v88
    %v121 = vunpack.c.l.b16 %v89
    %v122 = vunpack.c.l.b16 %v90
    %v123 = vunpack.c.l.b16 %v91
    %v124 = vunpack.c.l.b16 %v92
    %v125 = vunpack.c.l.b16 %v93
    %v126 = vpack.c.b16 %v111, %v110
    %v127 = vpack.c.b16 %v113, %v112
    %v128 = vpack.c.b16 %v115, %v114
    %v129 = vpack.c.b16 %v117, %v116
    %v130 = vpack.c.b16 %v119, %v118
    %v131 = vpack.c.b16 %v121, %v120
    %v132 = vpack.c.b16 %v123, %v122
    %v133 = vpack.c.b16 %v125, %v124
    %142 = vmatprep.subr.bf16.mxu0 0
    %143 = vmatpush1.bf16.msra.mxu0 %v133
    %144 = vmatprep.subr.bf16.mxu0 0
    %145 = vmatpush1.bf16.msra.mxu0 %v132
    %146 = vmatprep.subr.bf16.mxu0 0
    %147 = vmatpush1.bf16.msra.mxu0 %v131
    %148 = vmatprep.subr.bf16.mxu0 0
    %149 = vmatpush1.bf16.msra.mxu0 %v130
    %150 = vmatprep.subr.bf16.mxu0 0
    %151 = vmatpush1.bf16.msra.mxu0 %v129
    %152 = vmatprep.subr.bf16.mxu0 0
    %153 = vmatpush1.bf16.msra.mxu0 %v128
    %154 = vmatprep.subr.bf16.mxu0 0
    %155 = vmatpush1.bf16.msra.mxu0 %v127
    %156 = vmatprep.subr.bf16.mxu0 0
    %157 = vmatpush1.bf16.msra.mxu0 %v126
    %158 = vmatprep.subr.bf16.mxu0 0
    %159 = vmatpush2.bf16.msra.mxu0 0
    %160 = vmatprep.subr.bf16.mxu0 0
    %161 = vmatpush2.bf16.msra.mxu0 0
    %162 = vmatprep.subr.bf16.mxu0 0
    %163 = vmatpush2.bf16.msra.mxu0 0
    %164 = vmatprep.subr.bf16.mxu0 0
    %165 = vmatpush2.bf16.msra.mxu0 0
    %166 = vmatprep.subr.bf16.mxu0 0
    %167 = vmatpush2.bf16.msra.mxu0 0
    %168 = vmatprep.subr.bf16.mxu0 0
    %169 = vmatpush2.bf16.msra.mxu0 0
    %170 = vmatprep.subr.bf16.mxu0 0
    %171 = vmatpush2.bf16.msra.mxu0 0
    %172 = vmatprep.subr.bf16.mxu0 0
    %173 = vmatpush2.bf16.msra.mxu0 0
    %174 = vmatprep.mubr.bf16.mxu0 0
    %175 = vmatmul.mubr.bf16.gmra.mxu0 %v77
    %v176 = vpop.f32.mrf.mxu0
    %v177 = vadd.f32 0.0, %v176
    %v178 = vpop.f32.mrf.mxu0
    %v179 = vpop.f32.mrf.mxu0
    %v180 = vpop.f32.mrf.mxu0
    %181 = vdwg.mxu0
    %v182 = vmax.f32 %v177, 0.0
    %v183 = vpack.c.bf16 %v182, %v182
    %v184 = vld [vmem:[#allocation5] sm:$0xf]
    %v185 = vld [vmem:[#allocation5 + $0x4] sm:$0xf]
    %v186 = vld [vmem:[#allocation5 + $0x8] sm:$0xf]
    %v187 = vld [vmem:[#allocation5 + $0xc] sm:$0xf]
    %v188 = vld [vmem:[#allocation5 + $0x10] sm:$0xf]
    %v189 = vld [vmem:[#allocation5 + $0x14] sm:$0xf]
    %v190 = vld [vmem:[#allocation5 + $0x18] sm:$0xf]
    %v191 = vld [vmem:[#allocation5 + $0x1c] sm:$0xf]
    %v192 = vld [vmem:[#allocation5 + $0x20] sm:$0xf]
    %v193 = vld [vmem:[#allocation5 + $0x24] sm:$0xf]
    %v194 = vld [vmem:[#allocation5 + $0x28] sm:$0xf]
    %v195 = vld [vmem:[#allocation5 + $0x2c] sm:$0xf]
    %v196 = vld [vmem:[#allocation5 + $0x30] sm:$0xf]
    %v197 = vld [vmem:[#allocation5 + $0x34] sm:$0xf]
    %v198 = vld [vmem:[#allocation5 + $0x38] sm:$0xf]
    %v199 = vld [vmem:[#allocation5 + $0x3c] sm:$0xf]
    %v216 = vunpack.c.l.b16 %v184
    %v217 = vunpack.c.l.b16 %v185
    %v218 = vunpack.c.l.b16 %v186
    %v219 = vunpack.c.l.b16 %v187
    %v220 = vunpack.c.l.b16 %v188
    %v221 = vunpack.c.l.b16 %v189
    %v222 = vunpack.c.l.b16 %v190
    %v223 = vunpack.c.l.b16 %v191
    %v224 = vunpack.c.l.b16 %v192
    %v225 = vunpack.c.l.b16 %v193
    %v226 = vunpack.c.l.b16 %v194
    %v227 = vunpack.c.l.b16 %v195
    %v228 = vunpack.c.l.b16 %v196
    %v229 = vunpack.c.l.b16 %v197
    %v230 = vunpack.c.l.b16 %v198
    %v231 = vunpack.c.l.b16 %v199
    %v232 = vpack.c.b16 %v217, %v216
    %v233 = vpack.c.b16 %v219, %v218
    %v234 = vpack.c.b16 %v221, %v220
    %v235 = vpack.c.b16 %v223, %v222
    %v236 = vpack.c.b16 %v225, %v224
    %v237 = vpack.c.b16 %v227, %v226
    %v238 = vpack.c.b16 %v229, %v228
    %v239 = vpack.c.b16 %v231, %v230
    %248 = vmatprep.subr.bf16.mxu0 0
    %249 = vmatpush1.bf16.msra.mxu0 %v239
    %250 = vmatprep.subr.bf16.mxu0 0
    %251 = vmatpush1.bf16.msra.mxu0 %v238
    %252 = vmatprep.subr.bf16.mxu0 0
    %253 = vmatpush1.bf16.msra.mxu0 %v237
    %254 = vmatprep.subr.bf16.mxu0 0
    %255 = vmatpush1.bf16.msra.mxu0 %v236
    %256 = vmatprep.subr.bf16.mxu0 0
    %257 = vmatpush1.bf16.msra.mxu0 %v235
    %258 = vmatprep.subr.bf16.mxu0 0
    %259 = vmatpush1.bf16.msra.mxu0 %v234
    %260 = vmatprep.subr.bf16.mxu0 0
    %261 = vmatpush1.bf16.msra.mxu0 %v233
    %262 = vmatprep.subr.bf16.mxu0 0
    %263 = vmatpush1.bf16.msra.mxu0 %v232
    %264 = vmatprep.subr.bf16.mxu0 0
    %265 = vmatpush2.bf16.msra.mxu0 0
    %266 = vmatprep.subr.bf16.mxu0 0
    %267 = vmatpush2.bf16.msra.mxu0 0
    %268 = vmatprep.subr.bf16.mxu0 0
    %269 = vmatpush2.bf16.msra.mxu0 0
    %270 = vmatprep.subr.bf16.mxu0 0
    %271 = vmatpush2.bf16.msra.mxu0 0
    %272 = vmatprep.subr.bf16.mxu0 0
    %273 = vmatpush2.bf16.msra.mxu0 0
    %274 = vmatprep.subr.bf16.mxu0 0
    %275 = vmatpush2.bf16.msra.mxu0 0
    %276 = vmatprep.subr.bf16.mxu0 0
    %277 = vmatpush2.bf16.msra.mxu0 0
    %278 = vmatprep.subr.bf16.mxu0 0
    %279 = vmatpush2.bf16.msra.mxu0 0
    %280 = vmatprep.mubr.bf16.mxu0 0
    %281 = vmatmul.mubr.bf16.gmra.mxu0 %v183
    %v282 = vpop.f32.mrf.mxu0
    %v283 = vadd.f32 0.0, %v282
    %v284 = vpop.f32.mrf.mxu0
    %v285 = vpop.f32.mrf.mxu0
    %v286 = vpop.f32.mrf.mxu0
    %287 = vdwg.mxu0
    %v288 = vmax.f32 %v283, 0.0
    %v289 = vpack.c.bf16 %v288, %v288
    %v290 = vld [vmem:[#allocation7] sm:$0xf]
    %v291 = vld [vmem:[#allocation7 + $0x4] sm:$0xf]
    %v292 = vld [vmem:[#allocation7 + $0x8] sm:$0xf]
    %v293 = vld [vmem:[#allocation7 + $0xc] sm:$0xf]
    %v294 = vld [vmem:[#allocation7 + $0x10] sm:$0xf]
    %v295 = vld [vmem:[#allocation7 + $0x14] sm:$0xf]
    %v296 = vld [vmem:[#allocation7 + $0x18] sm:$0xf]
    %v297 = vld [vmem:[#allocation7 + $0x1c] sm:$0xf]
    %v298 = vld [vmem:[#allocation7 + $0x20] sm:$0xf]
    %v299 = vld [vmem:[#allocation7 + $0x24] sm:$0xf]
    %v300 = vld [vmem:[#allocation7 + $0x28] sm:$0xf]
    %v301 = vld [vmem:[#allocation7 + $0x2c] sm:$0xf]
    %v302 = vld [vmem:[#allocation7 + $0x30] sm:$0xf]
    %v303 = vld [vmem:[#allocation7 + $0x34] sm:$0xf]
    %v304 = vld [vmem:[#allocation7 + $0x38] sm:$0xf]
    %v305 = vld [vmem:[#allocation7 + $0x3c] sm:$0xf]
    %v322 = vunpack.c.l.b16 %v290
    %v323 = vunpack.c.l.b16 %v291
    %v324 = vunpack.c.l.b16 %v292
    %v325 = vunpack.c.l.b16 %v293
    %v326 = vunpack.c.l.b16 %v294
    %v327 = vunpack.c.l.b16 %v295
    %v328 = vunpack.c.l.b16 %v296
    %v329 = vunpack.c.l.b16 %v297
    %v330 = vunpack.c.l.b16 %v298
    %v331 = vunpack.c.l.b16 %v299
    %v332 = vunpack.c.l.b16 %v300
    %v333 = vunpack.c.l.b16 %v301
    %v334 = vunpack.c.l.b16 %v302
    %v335 = vunpack.c.l.b16 %v303
    %v336 = vunpack.c.l.b16 %v304
    %v337 = vunpack.c.l.b16 %v305
    %v338 = vpack.c.b16 %v323, %v322
    %v339 = vpack.c.b16 %v325, %v324
    %v340 = vpack.c.b16 %v327, %v326
    %v341 = vpack.c.b16 %v329, %v328
    %v342 = vpack.c.b16 %v331, %v330
    %v343 = vpack.c.b16 %v333, %v332
    %v344 = vpack.c.b16 %v335, %v334
    %v345 = vpack.c.b16 %v337, %v336
    %354 = vmatprep.subr.bf16.mxu0 0
    %355 = vmatpush1.bf16.msra.mxu0 %v345
    %356 = vmatprep.subr.bf16.mxu0 0
    %357 = vmatpush1.bf16.msra.mxu0 %v344
    %358 = vmatprep.subr.bf16.mxu0 0
    %359 = vmatpush1.bf16.msra.mxu0 %v343
    %360 = vmatprep.subr.bf16.mxu0 0
    %361 = vmatpush1.bf16.msra.mxu0 %v342
    %362 = vmatprep.subr.bf16.mxu0 0
    %363 = vmatpush1.bf16.msra.mxu0 %v341
    %364 = vmatprep.subr.bf16.mxu0 0
    %365 = vmatpush1.bf16.msra.mxu0 %v340
    %366 = vmatprep.subr.bf16.mxu0 0
    %367 = vmatpush1.bf16.msra.mxu0 %v339
    %368 = vmatprep.subr.bf16.mxu0 0
    %369 = vmatpush1.bf16.msra.mxu0 %v338
    %370 = vmatprep.subr.bf16.mxu0 0
    %371 = vmatpush2.bf16.msra.mxu0 0
    %372 = vmatprep.subr.bf16.mxu0 0
    %373 = vmatpush2.bf16.msra.mxu0 0
    %374 = vmatprep.subr.bf16.mxu0 0
    %375 = vmatpush2.bf16.msra.mxu0 0
    %376 = vmatprep.subr.bf16.mxu0 0
    %377 = vmatpush2.bf16.msra.mxu0 0
    %378 = vmatprep.subr.bf16.mxu0 0
    %379 = vmatpush2.bf16.msra.mxu0 0
    %380 = vmatprep.subr.bf16.mxu0 0
    %381 = vmatpush2.bf16.msra.mxu0 0
    %382 = vmatprep.subr.bf16.mxu0 0
    %383 = vmatpush2.bf16.msra.mxu0 0
    %384 = vmatprep.subr.bf16.mxu0 0
    %385 = vmatpush2.bf16.msra.mxu0 0
    %386 = vmatprep.mubr.bf16.mxu0 0
    %387 = vmatmul.mubr.bf16.gmra.mxu0 %v289
    %v388 = vpop.f32.mrf.mxu0
    %v389 = vadd.f32 0.0, %v388
    %v390 = vpop.f32.mrf.mxu0
    %v391 = vpop.f32.mrf.mxu0
    %v392 = vpop.f32.mrf.mxu0
    %393 = vdwg.mxu0
    %v394 = vmax.f32 %v389, 0.0
    %v395 = vpack.c.bf16 %v394, %v394
    %v396 = vld [vmem:[#allocation8] sm:$0xf]
    %v397 = vld [vmem:[#allocation8 + $0x4] sm:$0xf]
    %v398 = vld [vmem:[#allocation8 + $0x8] sm:$0xf]
    %v399 = vld [vmem:[#allocation8 + $0xc] sm:$0xf]
    %v400 = vld [vmem:[#allocation8 + $0x10] sm:$0xf]
    %v401 = vld [vmem:[#allocation8 + $0x14] sm:$0xf]
    %v402 = vld [vmem:[#allocation8 + $0x18] sm:$0xf]
    %v403 = vld [vmem:[#allocation8 + $0x1c] sm:$0xf]
    %v404 = vld [vmem:[#allocation8 + $0x20] sm:$0xf]
    %v405 = vld [vmem:[#allocation8 + $0x24] sm:$0xf]
    %v406 = vld [vmem:[#allocation8 + $0x28] sm:$0xf]
    %v407 = vld [vmem:[#allocation8 + $0x2c] sm:$0xf]
    %v408 = vld [vmem:[#allocation8 + $0x30] sm:$0xf]
    %v409 = vld [vmem:[#allocation8 + $0x34] sm:$0xf]
    %v410 = vld [vmem:[#allocation8 + $0x38] sm:$0xf]
    %v411 = vld [vmem:[#allocation8 + $0x3c] sm:$0xf]
    %v428 = vunpack.c.l.b16 %v396
    %v429 = vunpack.c.l.b16 %v397
    %v430 = vunpack.c.l.b16 %v398
    %v431 = vunpack.c.l.b16 %v399
    %v432 = vunpack.c.l.b16 %v400
    %v433 = vunpack.c.l.b16 %v401
    %v434 = vunpack.c.l.b16 %v402
    %v435 = vunpack.c.l.b16 %v403
    %v436 = vunpack.c.l.b16 %v404
    %v437 = vunpack.c.l.b16 %v405
    %v438 = vunpack.c.l.b16 %v406
    %v439 = vunpack.c.l.b16 %v407
    %v440 = vunpack.c.l.b16 %v408
    %v441 = vunpack.c.l.b16 %v409
    %v442 = vunpack.c.l.b16 %v410
    %v443 = vunpack.c.l.b16 %v411
    %v444 = vpack.c.b16 %v429, %v428
    %v445 = vpack.c.b16 %v431, %v430
    %v446 = vpack.c.b16 %v433, %v432
    %v447 = vpack.c.b16 %v435, %v434
    %v448 = vpack.c.b16 %v437, %v436
    %v449 = vpack.c.b16 %v439, %v438
    %v450 = vpack.c.b16 %v441, %v440
    %v451 = vpack.c.b16 %v443, %v442
    %460 = vmatprep.subr.bf16.mxu0 0
    %461 = vmatpush1.bf16.msra.mxu0 %v451
    %462 = vmatprep.subr.bf16.mxu0 0
    %463 = vmatpush1.bf16.msra.mxu0 %v450
    %464 = vmatprep.subr.bf16.mxu0 0
    %465 = vmatpush1.bf16.msra.mxu0 %v449
    %466 = vmatprep.subr.bf16.mxu0 0
    %467 = vmatpush1.bf16.msra.mxu0 %v448
    %468 = vmatprep.subr.bf16.mxu0 0
    %469 = vmatpush1.bf16.msra.mxu0 %v447
    %470 = vmatprep.subr.bf16.mxu0 0
    %471 = vmatpush1.bf16.msra.mxu0 %v446
    %472 = vmatprep.subr.bf16.mxu0 0
    %473 = vmatpush1.bf16.msra.mxu0 %v445
    %474 = vmatprep.subr.bf16.mxu0 0
    %475 = vmatpush1.bf16.msra.mxu0 %v444
    %476 = vmatprep.subr.bf16.mxu0 0
    %477 = vmatpush2.bf16.msra.mxu0 0
    %478 = vmatprep.subr.bf16.mxu0 0
    %479 = vmatpush2.bf16.msra.mxu0 0
    %480 = vmatprep.subr.bf16.mxu0 0
    %481 = vmatpush2.bf16.msra.mxu0 0
    %482 = vmatprep.subr.bf16.mxu0 0
    %483 = vmatpush2.bf16.msra.mxu0 0
    %484 = vmatprep.subr.bf16.mxu0 0
    %485 = vmatpush2.bf16.msra.mxu0 0
    %486 = vmatprep.subr.bf16.mxu0 0
    %487 = vmatpush2.bf16.msra.mxu0 0
    %488 = vmatprep.subr.bf16.mxu0 0
    %489 = vmatpush2.bf16.msra.mxu0 0
    %490 = vmatprep.subr.bf16.mxu0 0
    %491 = vmatpush2.bf16.msra.mxu0 0
    %492 = vmatprep.mubr.bf16.mxu0 0
    %493 = vmatmul.mubr.bf16.gmra.mxu0 %v395
    %v494 = vpop.f32.mrf.mxu0
    %v495 = vadd.f32 0.0, %v494
    %v496 = vpop.f32.mrf.mxu0
    %v497 = vpop.f32.mrf.mxu0
    %v498 = vpop.f32.mrf.mxu0
    %499 = vdwg.mxu0
    %500 = vst [vmem:[#allocation10] sm:$0xff] %v495
    // Predicated region
    $region38: #{mlp_forward.1} parent=1 // pred_check
      _
    $region39: #{mlp_forward.1} parent=1 // pred_check_branch
      %502 = sbr.rel (0) target = $region41
    $region40: #{mlp_forward.1} parent=1 // pred_region
      %s504 = ssub.s32 128, 128
      %505 = vsyncadd [#allocation4], %s504
      %s507 = sshll.u32 [#allocation10], 4
      %s508 = int_to_ptr.vmem [resolvable:$true] %s507
      %510 = dma.vmem_to_hbm [thread:$0]  %s508, 128, %s5, [#allocation4]
    $region41: #{mlp_forward.1} parent=1 // pred_fallthru
      _
    // Predicated region
    $region42: #{mlp_forward.1} parent=1 // pred_check
      _
    $region43: #{mlp_forward.1} parent=1 // pred_check_branch
      %512 = sbr.rel (0) target = $region45
    $region44: #{mlp_forward.1} parent=1 // pred_region
      %513 = dma.done [#allocation4], 128
    $region45: #{mlp_forward.1} parent=1 // pred_fallthru
      _
    %514 = vsyncpa [#allocation3], 1
    %515 = vsyncpa [#allocation6], 1
    %516 = vsyncpa [#allocation9], 1
    %517 = vsyncpa [#allocation4], 1

</llo_original>
